<compile_context>
chip_gen: v6e
topology: v6e:2x2x1
jax: 0.10.0
libtpu: 0.0.40
codegen_flags: <defaults>
</compile_context>

<pallas_src>
import jax
import jax.numpy as jnp
from jax import lax
from jax.experimental import pallas as pl
from jax.experimental.pallas import tpu as pltpu

BN_EPS = 1e-5
LANE = 128             # lane width of every pixel tile
MAX_TILE_ROWS = 1024   # up to 512 KiB f32 per input block (amortize grid-step cost)
CHUNK_ROWS = 32        # inner-loop row chunk: ~20 live vregs per chunk position
MIN_GRID_STEPS = 8     # keep megacore (v7x) and the DMA pipeline fed


def _round_up(x, m):
    return ((x + m - 1) // m) * m


def _make_bw2col_kernel(chunk_rows, n_chunks):
    """Build the fused (folded-BN + conv1x1(1->10) + ReLU + conv1x1(10->3) + ReLU) kernel.

    p_ref: (53,) f32 in SMEM, packed scalars:
             [0:10]   a[c]      folded BN*conv1 scale per channel
             [10:20]  s[c]      folded BN*conv1 shift per channel
             [20:50]  w2[o,c]   row-major (3,10)
             [50:53]  b2[o]
    x_ref: (TR, 128)    pixel tile (single input channel)
    o_ref: (3, TR, 128) output tile (3 channels)
    """

    def kernel(p_ref, x_ref, o_ref):
        # Hoist all 43 SMEM scalar reads once (NOT per chunk; no pre-broadcast).
        a = [p_ref[c] for c in range(10)]
        s = [p_ref[10 + c] for c in range(10)]
        w2 = [[p_ref[20 + o * 10 + c] for c in range(10)] for o in range(3)]
        b2 = [p_ref[50 + o] for o in range(3)]

        def chunk_body(i, carry):
            r0 = pl.multiple_of(i * chunk_rows, chunk_rows)
            x = x_ref[pl.ds(r0, chunk_rows), :]            # (chunk, 128)

            acc0, acc1, acc2 = b2[0], b2[1], b2[2]         # scalars, broadcast on add
            for c in range(10):
                y1c = jnp.maximum(a[c] * x + s[c], 0.0)    # relu(BN+conv1) channel c
                acc0 = acc0 + w2[0][c] * y1c
                acc1 = acc1 + w2[1][c] * y1c
                acc2 = acc2 + w2[2][c] * y1c

            # Per-channel direct stores: no concatenate, no extra VMEM copy.
            o_ref[0, pl.ds(r0, chunk_rows), :] = jnp.maximum(acc0, 0.0)
            o_ref[1, pl.ds(r0, chunk_rows), :] = jnp.maximum(acc1, 0.0)
            o_ref[2, pl.ds(r0, chunk_rows), :] = jnp.maximum(acc2, 0.0)
            return carry

        unroll = n_chunks if n_chunks <= 8 else 4
        lax.fori_loop(0, n_chunks, chunk_body, 0, unroll=unroll)

    return kernel


@jax.jit
def model_forward(x_nchw, params):
    """x_nchw: (N, 1, H, W) float32 -> (N, 3, H, W) float32 (the bw2col output)."""
    n, c, h, w = x_nchw.shape
    assert c == 1, "Model expects single-channel NCHW input"
    x = x_nchw.astype(jnp.float32)
    hw = h * w

    # --- BatchNorm2d(1), training mode: biased batch stats in ONE fused pass ---
    mean = jnp.mean(x)
    ex2 = jnp.mean(jnp.square(x))
    var = jnp.maximum(ex2 - mean * mean, 0.0)
    inv_std = lax.rsqrt(var + BN_EPS)

    gamma = params["gamma"].reshape(())
    beta = params["beta"].reshape(())
    w1 = params["w1"].reshape(10)        # (10,1) -> (10,)
    b1 = params["b1"].reshape(10)
    w2 = params["w2"].reshape(3, 10)
    b2 = params["b2"].reshape(3)

    # Fold BN + conv1 (Cin=1) into a per-channel affine.
    bn_scale = gamma * inv_std
    bn_shift = beta - gamma * mean * inv_std
    a_vec = w1 * bn_scale                # (10,)
    s_vec = w1 * bn_shift + b1           # (10,)
    packed = jnp.concatenate([a_vec, s_vec, w2.reshape(-1), b2])   # (53,) f32

    # --- Pixel tiling: lane-dense (tile_rows, 128) blocks, grid (N, n_tiles) ---
    rows = pl.cdiv(hw, LANE)
    rows8 = _round_up(rows, 8)                       # sublane alignment
    tile_rows = min(MAX_TILE_ROWS, rows8)
    # Ensure enough parallel grid steps to feed both v7x TensorCores / pipeline.
    if n * pl.cdiv(rows8, tile_rows) < MIN_GRID_STEPS and rows8 > 8:
        want_tiles = pl.cdiv(MIN_GRID_STEPS, n)
        tile_rows = max(8, _round_up(pl.cdiv(rows8, want_tiles), 8))
        tile_rows = min(tile_rows, MAX_TILE_ROWS)
    chunk_rows = tile_rows if tile_rows <= CHUNK_ROWS else CHUNK_ROWS
    if tile_rows % chunk_rows:
        tile_rows = _round_up(tile_rows, chunk_rows)
    rows_pad = _round_up(rows8, tile_rows)
    hw_pad = rows_pad * LANE
    n_chunks = tile_rows // chunk_rows

    x_flat = x.reshape(n, 1, hw)
    if hw_pad != hw:                                  # only when not tile-aligned
        x_flat = jnp.pad(x_flat, ((0, 0), (0, 0), (0, hw_pad - hw)))
    x4 = x_flat.reshape(n, 1, rows_pad, LANE)

    grid = (n, rows_pad // tile_rows)
    kernel = _make_bw2col_kernel(chunk_rows, n_chunks)
    cost = pl.CostEstimate(flops=93 * n * hw_pad,
                           transcendentals=0,
                           bytes_accessed=16 * n * hw_pad)

    out = pl.pallas_call(
        kernel,
        out_shape=jax.ShapeDtypeStruct((n, 3, rows_pad, LANE), jnp.float32),
        grid=grid,
        in_specs=[
            # Packed scalar parameters: whole array resident in SMEM.
            pl.BlockSpec(memory_space=pltpu.MemorySpace.SMEM),
            # Pixel tile: (N, 1, R, 128) -> kernel sees (TR, 128).
            pl.BlockSpec((None, None, tile_rows, LANE), lambda i, t: (i, 0, t, 0)),
        ],
        # Output written directly in (N, 3, pixel) order -> kernel sees (3, TR, 128).
        out_specs=pl.BlockSpec((None, 3, tile_rows, LANE), lambda i, t: (i, 0, t, 0)),
        compiler_params=pltpu.CompilerParams(
            dimension_semantics=("parallel", "parallel")),
        cost_estimate=cost,
    )(packed, x4)

    out = out.reshape(n, 3, hw_pad)
    if hw_pad != hw:
        out = out[:, :, :hw]
    return out.reshape(n, 3, h, w)


def reference_forward(x_nchw, params):
    """Pure-JAX reference of the same math for a correctness check."""
    x = x_nchw.astype(jnp.float32)
    mean = jnp.mean(x)
    var = jnp.mean((x - mean) ** 2)
    xn = (x - mean) * jax.lax.rsqrt(var + BN_EPS)
    xn = xn * params["gamma"][0, 0] + params["beta"][0, 0]      # (N,1,H,W)

    w1 = params["w1"]          # (10, 1)
    b1 = params["b1"][:, 0]    # (10,)
    w2 = params["w2"]          # (3, 10)
    b2 = params["b2"][:, 0]    # (3,)

    y1 = jnp.einsum("oc,nchw->nohw", w1, xn) + b1[None, :, None, None]
    y1 = jnp.maximum(y1, 0.0)
    y2 = jnp.einsum("oc,nchw->nohw", w2, y1) + b2[None, :, None, None]
    return jnp.maximum(y2, 0.0)


def init_params(key):
    k1, k2, k3, k4 = jax.random.split(key, 4)
    # Deterministic synthetic weights (shapes match the nn.Conv2d / BatchNorm2d defs).
    return {
        "gamma": jnp.ones((1, 1), jnp.float32),
        "beta":  jnp.zeros((1, 1), jnp.float32),
        "w1": jax.random.normal(k1, (10, 1), jnp.float32) * 0.5,
        "b1": jax.random.normal(k2, (10, 1), jnp.float32) * 0.1,
        "w2": jax.random.normal(k3, (3, 10), jnp.float32) * 0.3,
        "b2": jax.random.normal(k4, (3, 1), jnp.float32) * 0.1,
    }


if __name__ == "__main__":
    key = jax.random.PRNGKey(0)
    k_x, k_x2, k_x3, k_p = jax.random.split(key, 4)
    params = init_params(k_p)

    # Case 1: small NCHW single-channel input (ragged rows, padded path).
    x = jax.random.normal(k_x, (2, 1, 16, 16), jnp.float32)
    out = jax.block_until_ready(model_forward(x, params))
    ref = jax.block_until_ready(reference_forward(x, params))
    assert out.shape == (2, 3, 16, 16), out.shape
    assert jnp.allclose(out, ref, rtol=1e-4, atol=1e-4), "Pallas output mismatch vs reference"

    # Case 2: H*W not a multiple of 128 (exercises the pad/slice path).
    x2 = jax.random.normal(k_x2, (1, 1, 12, 12), jnp.float32)
    out2 = jax.block_until_ready(model_forward(x2, params))
    ref2 = jax.block_until_ready(reference_forward(x2, params))
    assert out2.shape == (1, 3, 12, 12), out2.shape
    assert jnp.allclose(out2, ref2, rtol=1e-4, atol=1e-4), "Pallas output mismatch (padded case)"

    # Case 3: tile-aligned input (no pad/slice, multi-tile parallel grid).
    x3 = jax.random.normal(k_x3, (2, 1, 64, 64), jnp.float32)
    out3 = jax.block_until_ready(model_forward(x3, params))
    ref3 = jax.block_until_ready(reference_forward(x3, params))
    assert out3.shape == (2, 3, 64, 64), out3.shape
    assert jnp.allclose(out3, ref3, rtol=1e-4, atol=1e-4), "Pallas output mismatch (aligned case)"

    print("KERNEL_OK")
</pallas_src>

<mosaic_0001>
module attributes {stable_mosaic.version = 11 : i64} {
  func.func @kernel(%arg0: i32, %arg1: i32, %arg2: memref<53xf32, #tpu.memory_space<smem>>, %arg3: memref<1x1x8x128xf32, #tpu.memory_space<vmem>>, %arg4: memref<1x3x8x128xf32, #tpu.memory_space<vmem>>) attributes {dimension_semantics = [#tpu.dimension_semantics<parallel>, #tpu.dimension_semantics<parallel>], iteration_bounds = array<i64: 2, 1>, scalar_prefetch = 0 : i64, scratch_operands = 0 : i64, tpu.core_type = #tpu.core_type<tc>, window_params = [{transform_indices = @transform_0, window_bounds = array<i64: 53>}, {transform_indices = @transform_1, window_bounds = array<i64: 1, 1, 8, 128>}, {transform_indices = @transform_2, window_bounds = array<i64: 1, 3, 8, 128>}]} {
    %c0 = arith.constant 0 : index
    %0 = memref.load %arg2[%c0] : memref<53xf32, #tpu.memory_space<smem>>
    %c1 = arith.constant 1 : index
    %1 = memref.load %arg2[%c1] : memref<53xf32, #tpu.memory_space<smem>>
    %c2 = arith.constant 2 : index
    %2 = memref.load %arg2[%c2] : memref<53xf32, #tpu.memory_space<smem>>
    %c3 = arith.constant 3 : index
    %3 = memref.load %arg2[%c3] : memref<53xf32, #tpu.memory_space<smem>>
    %c4 = arith.constant 4 : index
    %4 = memref.load %arg2[%c4] : memref<53xf32, #tpu.memory_space<smem>>
    %c5 = arith.constant 5 : index
    %5 = memref.load %arg2[%c5] : memref<53xf32, #tpu.memory_space<smem>>
    %c6 = arith.constant 6 : index
    %6 = memref.load %arg2[%c6] : memref<53xf32, #tpu.memory_space<smem>>
    %c7 = arith.constant 7 : index
    %7 = memref.load %arg2[%c7] : memref<53xf32, #tpu.memory_space<smem>>
    %c8 = arith.constant 8 : index
    %8 = memref.load %arg2[%c8] : memref<53xf32, #tpu.memory_space<smem>>
    %c9 = arith.constant 9 : index
    %9 = memref.load %arg2[%c9] : memref<53xf32, #tpu.memory_space<smem>>
    %c10 = arith.constant 10 : index
    %10 = memref.load %arg2[%c10] : memref<53xf32, #tpu.memory_space<smem>>
    %c11 = arith.constant 11 : index
    %11 = memref.load %arg2[%c11] : memref<53xf32, #tpu.memory_space<smem>>
    %c12 = arith.constant 12 : index
    %12 = memref.load %arg2[%c12] : memref<53xf32, #tpu.memory_space<smem>>
    %c13 = arith.constant 13 : index
    %13 = memref.load %arg2[%c13] : memref<53xf32, #tpu.memory_space<smem>>
    %c14 = arith.constant 14 : index
    %14 = memref.load %arg2[%c14] : memref<53xf32, #tpu.memory_space<smem>>
    %c15 = arith.constant 15 : index
    %15 = memref.load %arg2[%c15] : memref<53xf32, #tpu.memory_space<smem>>
    %c16 = arith.constant 16 : index
    %16 = memref.load %arg2[%c16] : memref<53xf32, #tpu.memory_space<smem>>
    %c17 = arith.constant 17 : index
    %17 = memref.load %arg2[%c17] : memref<53xf32, #tpu.memory_space<smem>>
    %c18 = arith.constant 18 : index
    %18 = memref.load %arg2[%c18] : memref<53xf32, #tpu.memory_space<smem>>
    %c19 = arith.constant 19 : index
    %19 = memref.load %arg2[%c19] : memref<53xf32, #tpu.memory_space<smem>>
    %c20 = arith.constant 20 : index
    %20 = memref.load %arg2[%c20] : memref<53xf32, #tpu.memory_space<smem>>
    %c21 = arith.constant 21 : index
    %21 = memref.load %arg2[%c21] : memref<53xf32, #tpu.memory_space<smem>>
    %c22 = arith.constant 22 : index
    %22 = memref.load %arg2[%c22] : memref<53xf32, #tpu.memory_space<smem>>
    %c23 = arith.constant 23 : index
    %23 = memref.load %arg2[%c23] : memref<53xf32, #tpu.memory_space<smem>>
    %c24 = arith.constant 24 : index
    %24 = memref.load %arg2[%c24] : memref<53xf32, #tpu.memory_space<smem>>
    %c25 = arith.constant 25 : index
    %25 = memref.load %arg2[%c25] : memref<53xf32, #tpu.memory_space<smem>>
    %c26 = arith.constant 26 : index
    %26 = memref.load %arg2[%c26] : memref<53xf32, #tpu.memory_space<smem>>
    %c27 = arith.constant 27 : index
    %27 = memref.load %arg2[%c27] : memref<53xf32, #tpu.memory_space<smem>>
    %c28 = arith.constant 28 : index
    %28 = memref.load %arg2[%c28] : memref<53xf32, #tpu.memory_space<smem>>
    %c29 = arith.constant 29 : index
    %29 = memref.load %arg2[%c29] : memref<53xf32, #tpu.memory_space<smem>>
    %c30 = arith.constant 30 : index
    %30 = memref.load %arg2[%c30] : memref<53xf32, #tpu.memory_space<smem>>
    %c31 = arith.constant 31 : index
    %31 = memref.load %arg2[%c31] : memref<53xf32, #tpu.memory_space<smem>>
    %c32 = arith.constant 32 : index
    %32 = memref.load %arg2[%c32] : memref<53xf32, #tpu.memory_space<smem>>
    %c33 = arith.constant 33 : index
    %33 = memref.load %arg2[%c33] : memref<53xf32, #tpu.memory_space<smem>>
    %c34 = arith.constant 34 : index
    %34 = memref.load %arg2[%c34] : memref<53xf32, #tpu.memory_space<smem>>
    %c35 = arith.constant 35 : index
    %35 = memref.load %arg2[%c35] : memref<53xf32, #tpu.memory_space<smem>>
    %c36 = arith.constant 36 : index
    %36 = memref.load %arg2[%c36] : memref<53xf32, #tpu.memory_space<smem>>
    %c37 = arith.constant 37 : index
    %37 = memref.load %arg2[%c37] : memref<53xf32, #tpu.memory_space<smem>>
    %c38 = arith.constant 38 : index
    %38 = memref.load %arg2[%c38] : memref<53xf32, #tpu.memory_space<smem>>
    %c39 = arith.constant 39 : index
    %39 = memref.load %arg2[%c39] : memref<53xf32, #tpu.memory_space<smem>>
    %c40 = arith.constant 40 : index
    %40 = memref.load %arg2[%c40] : memref<53xf32, #tpu.memory_space<smem>>
    %c41 = arith.constant 41 : index
    %41 = memref.load %arg2[%c41] : memref<53xf32, #tpu.memory_space<smem>>
    %c42 = arith.constant 42 : index
    %42 = memref.load %arg2[%c42] : memref<53xf32, #tpu.memory_space<smem>>
    %c43 = arith.constant 43 : index
    %43 = memref.load %arg2[%c43] : memref<53xf32, #tpu.memory_space<smem>>
    %c44 = arith.constant 44 : index
    %44 = memref.load %arg2[%c44] : memref<53xf32, #tpu.memory_space<smem>>
    %c45 = arith.constant 45 : index
    %45 = memref.load %arg2[%c45] : memref<53xf32, #tpu.memory_space<smem>>
    %c46 = arith.constant 46 : index
    %46 = memref.load %arg2[%c46] : memref<53xf32, #tpu.memory_space<smem>>
    %c47 = arith.constant 47 : index
    %47 = memref.load %arg2[%c47] : memref<53xf32, #tpu.memory_space<smem>>
    %c48 = arith.constant 48 : index
    %48 = memref.load %arg2[%c48] : memref<53xf32, #tpu.memory_space<smem>>
    %c49 = arith.constant 49 : index
    %49 = memref.load %arg2[%c49] : memref<53xf32, #tpu.memory_space<smem>>
    %c50 = arith.constant 50 : index
    %50 = memref.load %arg2[%c50] : memref<53xf32, #tpu.memory_space<smem>>
    %c51 = arith.constant 51 : index
    %51 = memref.load %arg2[%c51] : memref<53xf32, #tpu.memory_space<smem>>
    %c52 = arith.constant 52 : index
    %52 = memref.load %arg2[%c52] : memref<53xf32, #tpu.memory_space<smem>>
    %c0_i32 = arith.constant 0 : i32
    %c8_i32 = arith.constant 8 : i32
    %53 = arith.muli %c0_i32, %c8_i32 : i32
    %54 = tpu.assume_multiple %53, 8 : i32
    %c0_0 = arith.constant 0 : index
    %c0_1 = arith.constant 0 : index
    %55 = arith.index_cast %54 : i32 to index
    %c0_2 = arith.constant 0 : index
    %56 = vector.load %arg3[%c0_0, %c0_1, %55, %c0_2] : memref<1x1x8x128xf32, #tpu.memory_space<vmem>>, vector<1x1x8x128xf32>
    %57 = vector.shape_cast %56 : vector<1x1x8x128xf32> to vector<8x128xf32>
    %58 = vector.broadcast %0 : f32 to vector<8x128xf32>
    %59 = arith.mulf %58, %57 : vector<8x128xf32>
    %60 = vector.broadcast %10 : f32 to vector<8x128xf32>
    %61 = arith.addf %59, %60 : vector<8x128xf32>
    %cst = arith.constant 0.000000e+00 : f32
    %62 = vector.broadcast %cst : f32 to vector<8x128xf32>
    %63 = arith.maximumf %61, %62 : vector<8x128xf32>
    %64 = vector.broadcast %20 : f32 to vector<8x128xf32>
    %65 = arith.mulf %64, %63 : vector<8x128xf32>
    %66 = vector.broadcast %50 : f32 to vector<8x128xf32>
    %67 = arith.addf %66, %65 : vector<8x128xf32>
    %68 = vector.broadcast %30 : f32 to vector<8x128xf32>
    %69 = arith.mulf %68, %63 : vector<8x128xf32>
    %70 = vector.broadcast %51 : f32 to vector<8x128xf32>
    %71 = arith.addf %70, %69 : vector<8x128xf32>
    %72 = vector.broadcast %40 : f32 to vector<8x128xf32>
    %73 = arith.mulf %72, %63 : vector<8x128xf32>
    %74 = vector.broadcast %52 : f32 to vector<8x128xf32>
    %75 = arith.addf %74, %73 : vector<8x128xf32>
    %76 = vector.broadcast %1 : f32 to vector<8x128xf32>
    %77 = arith.mulf %76, %57 : vector<8x128xf32>
    %78 = vector.broadcast %11 : f32 to vector<8x128xf32>
    %79 = arith.addf %77, %78 : vector<8x128xf32>
    %cst_3 = arith.constant 0.000000e+00 : f32
    %80 = vector.broadcast %cst_3 : f32 to vector<8x128xf32>
    %81 = arith.maximumf %79, %80 : vector<8x128xf32>
    %82 = vector.broadcast %21 : f32 to vector<8x128xf32>
    %83 = arith.mulf %82, %81 : vector<8x128xf32>
    %84 = arith.addf %67, %83 : vector<8x128xf32>
    %85 = vector.broadcast %31 : f32 to vector<8x128xf32>
    %86 = arith.mulf %85, %81 : vector<8x128xf32>
    %87 = arith.addf %71, %86 : vector<8x128xf32>
    %88 = vector.broadcast %41 : f32 to vector<8x128xf32>
    %89 = arith.mulf %88, %81 : vector<8x128xf32>
    %90 = arith.addf %75, %89 : vector<8x128xf32>
    %91 = vector.broadcast %2 : f32 to vector<8x128xf32>
    %92 = arith.mulf %91, %57 : vector<8x128xf32>
    %93 = vector.broadcast %12 : f32 to vector<8x128xf32>
    %94 = arith.addf %92, %93 : vector<8x128xf32>
    %cst_4 = arith.constant 0.000000e+00 : f32
    %95 = vector.broadcast %cst_4 : f32 to vector<8x128xf32>
    %96 = arith.maximumf %94, %95 : vector<8x128xf32>
    %97 = vector.broadcast %22 : f32 to vector<8x128xf32>
    %98 = arith.mulf %97, %96 : vector<8x128xf32>
    %99 = arith.addf %84, %98 : vector<8x128xf32>
    %100 = vector.broadcast %32 : f32 to vector<8x128xf32>
    %101 = arith.mulf %100, %96 : vector<8x128xf32>
    %102 = arith.addf %87, %101 : vector<8x128xf32>
    %103 = vector.broadcast %42 : f32 to vector<8x128xf32>
    %104 = arith.mulf %103, %96 : vector<8x128xf32>
    %105 = arith.addf %90, %104 : vector<8x128xf32>
    %106 = vector.broadcast %3 : f32 to vector<8x128xf32>
    %107 = arith.mulf %106, %57 : vector<8x128xf32>
    %108 = vector.broadcast %13 : f32 to vector<8x128xf32>
    %109 = arith.addf %107, %108 : vector<8x128xf32>
    %cst_5 = arith.constant 0.000000e+00 : f32
    %110 = vector.broadcast %cst_5 : f32 to vector<8x128xf32>
    %111 = arith.maximumf %109, %110 : vector<8x128xf32>
    %112 = vector.broadcast %23 : f32 to vector<8x128xf32>
    %113 = arith.mulf %112, %111 : vector<8x128xf32>
    %114 = arith.addf %99, %113 : vector<8x128xf32>
    %115 = vector.broadcast %33 : f32 to vector<8x128xf32>
    %116 = arith.mulf %115, %111 : vector<8x128xf32>
    %117 = arith.addf %102, %116 : vector<8x128xf32>
    %118 = vector.broadcast %43 : f32 to vector<8x128xf32>
    %119 = arith.mulf %118, %111 : vector<8x128xf32>
    %120 = arith.addf %105, %119 : vector<8x128xf32>
    %121 = vector.broadcast %4 : f32 to vector<8x128xf32>
    %122 = arith.mulf %121, %57 : vector<8x128xf32>
    %123 = vector.broadcast %14 : f32 to vector<8x128xf32>
    %124 = arith.addf %122, %123 : vector<8x128xf32>
    %cst_6 = arith.constant 0.000000e+00 : f32
    %125 = vector.broadcast %cst_6 : f32 to vector<8x128xf32>
    %126 = arith.maximumf %124, %125 : vector<8x128xf32>
    %127 = vector.broadcast %24 : f32 to vector<8x128xf32>
    %128 = arith.mulf %127, %126 : vector<8x128xf32>
    %129 = arith.addf %114, %128 : vector<8x128xf32>
    %130 = vector.broadcast %34 : f32 to vector<8x128xf32>
    %131 = arith.mulf %130, %126 : vector<8x128xf32>
    %132 = arith.addf %117, %131 : vector<8x128xf32>
    %133 = vector.broadcast %44 : f32 to vector<8x128xf32>
    %134 = arith.mulf %133, %126 : vector<8x128xf32>
    %135 = arith.addf %120, %134 : vector<8x128xf32>
    %136 = vector.broadcast %5 : f32 to vector<8x128xf32>
    %137 = arith.mulf %136, %57 : vector<8x128xf32>
    %138 = vector.broadcast %15 : f32 to vector<8x128xf32>
    %139 = arith.addf %137, %138 : vector<8x128xf32>
    %cst_7 = arith.constant 0.000000e+00 : f32
    %140 = vector.broadcast %cst_7 : f32 to vector<8x128xf32>
    %141 = arith.maximumf %139, %140 : vector<8x128xf32>
    %142 = vector.broadcast %25 : f32 to vector<8x128xf32>
    %143 = arith.mulf %142, %141 : vector<8x128xf32>
    %144 = arith.addf %129, %143 : vector<8x128xf32>
    %145 = vector.broadcast %35 : f32 to vector<8x128xf32>
    %146 = arith.mulf %145, %141 : vector<8x128xf32>
    %147 = arith.addf %132, %146 : vector<8x128xf32>
    %148 = vector.broadcast %45 : f32 to vector<8x128xf32>
    %149 = arith.mulf %148, %141 : vector<8x128xf32>
    %150 = arith.addf %135, %149 : vector<8x128xf32>
    %151 = vector.broadcast %6 : f32 to vector<8x128xf32>
    %152 = arith.mulf %151, %57 : vector<8x128xf32>
    %153 = vector.broadcast %16 : f32 to vector<8x128xf32>
    %154 = arith.addf %152, %153 : vector<8x128xf32>
    %cst_8 = arith.constant 0.000000e+00 : f32
    %155 = vector.broadcast %cst_8 : f32 to vector<8x128xf32>
    %156 = arith.maximumf %154, %155 : vector<8x128xf32>
    %157 = vector.broadcast %26 : f32 to vector<8x128xf32>
    %158 = arith.mulf %157, %156 : vector<8x128xf32>
    %159 = arith.addf %144, %158 : vector<8x128xf32>
    %160 = vector.broadcast %36 : f32 to vector<8x128xf32>
    %161 = arith.mulf %160, %156 : vector<8x128xf32>
    %162 = arith.addf %147, %161 : vector<8x128xf32>
    %163 = vector.broadcast %46 : f32 to vector<8x128xf32>
    %164 = arith.mulf %163, %156 : vector<8x128xf32>
    %165 = arith.addf %150, %164 : vector<8x128xf32>
    %166 = vector.broadcast %7 : f32 to vector<8x128xf32>
    %167 = arith.mulf %166, %57 : vector<8x128xf32>
    %168 = vector.broadcast %17 : f32 to vector<8x128xf32>
    %169 = arith.addf %167, %168 : vector<8x128xf32>
    %cst_9 = arith.constant 0.000000e+00 : f32
    %170 = vector.broadcast %cst_9 : f32 to vector<8x128xf32>
    %171 = arith.maximumf %169, %170 : vector<8x128xf32>
    %172 = vector.broadcast %27 : f32 to vector<8x128xf32>
    %173 = arith.mulf %172, %171 : vector<8x128xf32>
    %174 = arith.addf %159, %173 : vector<8x128xf32>
    %175 = vector.broadcast %37 : f32 to vector<8x128xf32>
    %176 = arith.mulf %175, %171 : vector<8x128xf32>
    %177 = arith.addf %162, %176 : vector<8x128xf32>
    %178 = vector.broadcast %47 : f32 to vector<8x128xf32>
    %179 = arith.mulf %178, %171 : vector<8x128xf32>
    %180 = arith.addf %165, %179 : vector<8x128xf32>
    %181 = vector.broadcast %8 : f32 to vector<8x128xf32>
    %182 = arith.mulf %181, %57 : vector<8x128xf32>
    %183 = vector.broadcast %18 : f32 to vector<8x128xf32>
    %184 = arith.addf %182, %183 : vector<8x128xf32>
    %cst_10 = arith.constant 0.000000e+00 : f32
    %185 = vector.broadcast %cst_10 : f32 to vector<8x128xf32>
    %186 = arith.maximumf %184, %185 : vector<8x128xf32>
    %187 = vector.broadcast %28 : f32 to vector<8x128xf32>
    %188 = arith.mulf %187, %186 : vector<8x128xf32>
    %189 = arith.addf %174, %188 : vector<8x128xf32>
    %190 = vector.broadcast %38 : f32 to vector<8x128xf32>
    %191 = arith.mulf %190, %186 : vector<8x128xf32>
    %192 = arith.addf %177, %191 : vector<8x128xf32>
    %193 = vector.broadcast %48 : f32 to vector<8x128xf32>
    %194 = arith.mulf %193, %186 : vector<8x128xf32>
    %195 = arith.addf %180, %194 : vector<8x128xf32>
    %196 = vector.broadcast %9 : f32 to vector<8x128xf32>
    %197 = arith.mulf %196, %57 : vector<8x128xf32>
    %198 = vector.broadcast %19 : f32 to vector<8x128xf32>
    %199 = arith.addf %197, %198 : vector<8x128xf32>
    %cst_11 = arith.constant 0.000000e+00 : f32
    %200 = vector.broadcast %cst_11 : f32 to vector<8x128xf32>
    %201 = arith.maximumf %199, %200 : vector<8x128xf32>
    %202 = vector.broadcast %29 : f32 to vector<8x128xf32>
    %203 = arith.mulf %202, %201 : vector<8x128xf32>
    %204 = arith.addf %189, %203 : vector<8x128xf32>
    %205 = vector.broadcast %39 : f32 to vector<8x128xf32>
    %206 = arith.mulf %205, %201 : vector<8x128xf32>
    %207 = arith.addf %192, %206 : vector<8x128xf32>
    %208 = vector.broadcast %49 : f32 to vector<8x128xf32>
    %209 = arith.mulf %208, %201 : vector<8x128xf32>
    %210 = arith.addf %195, %209 : vector<8x128xf32>
    %cst_12 = arith.constant 0.000000e+00 : f32
    %211 = vector.broadcast %cst_12 : f32 to vector<8x128xf32>
    %212 = arith.maximumf %204, %211 : vector<8x128xf32>
    %c0_13 = arith.constant 0 : index
    %c0_14 = arith.constant 0 : index
    %213 = arith.index_cast %54 : i32 to index
    %c0_15 = arith.constant 0 : index
    %214 = vector.load %arg4[%c0_13, %c0_14, %213, %c0_15] : memref<1x3x8x128xf32, #tpu.memory_space<vmem>>, vector<1x1x8x128xf32>
    %215 = vector.shape_cast %214 : vector<1x1x8x128xf32> to vector<8x128xf32>
    %216 = vector.shape_cast %212 : vector<8x128xf32> to vector<1x1x8x128xf32>
    tpu.vector_store %arg4[%c0_13, %c0_14, %213, %c0_15], %216 {strides = array<i32>} : memref<1x3x8x128xf32, #tpu.memory_space<vmem>>, vector<1x1x8x128xf32>,
    %cst_16 = arith.constant 0.000000e+00 : f32
    %217 = vector.broadcast %cst_16 : f32 to vector<8x128xf32>
    %218 = arith.maximumf %207, %217 : vector<8x128xf32>
    %c0_17 = arith.constant 0 : index
    %c1_18 = arith.constant 1 : index
    %219 = arith.index_cast %54 : i32 to index
    %c0_19 = arith.constant 0 : index
    %220 = vector.load %arg4[%c0_17, %c1_18, %219, %c0_19] : memref<1x3x8x128xf32, #tpu.memory_space<vmem>>, vector<1x1x8x128xf32>
    %221 = vector.shape_cast %220 : vector<1x1x8x128xf32> to vector<8x128xf32>
    %222 = vector.shape_cast %218 : vector<8x128xf32> to vector<1x1x8x128xf32>
    tpu.vector_store %arg4[%c0_17, %c1_18, %219, %c0_19], %222 {strides = array<i32>} : memref<1x3x8x128xf32, #tpu.memory_space<vmem>>, vector<1x1x8x128xf32>,
    %cst_20 = arith.constant 0.000000e+00 : f32
    %223 = vector.broadcast %cst_20 : f32 to vector<8x128xf32>
    %224 = arith.maximumf %210, %223 : vector<8x128xf32>
    %c0_21 = arith.constant 0 : index
    %c2_22 = arith.constant 2 : index
    %225 = arith.index_cast %54 : i32 to index
    %c0_23 = arith.constant 0 : index
    %226 = vector.load %arg4[%c0_21, %c2_22, %225, %c0_23] : memref<1x3x8x128xf32, #tpu.memory_space<vmem>>, vector<1x1x8x128xf32>
    %227 = vector.shape_cast %226 : vector<1x1x8x128xf32> to vector<8x128xf32>
    %228 = vector.shape_cast %224 : vector<8x128xf32> to vector<1x1x8x128xf32>
    tpu.vector_store %arg4[%c0_21, %c2_22, %225, %c0_23], %228 {strides = array<i32>} : memref<1x3x8x128xf32, #tpu.memory_space<vmem>>, vector<1x1x8x128xf32>,
    %c1_i32 = arith.constant 1 : i32
    return
  }
  func.func @transform_0(%arg0: i32, %arg1: i32) -> i32 {
    %c0_i32 = arith.constant 0 : i32
    %c0_i32_0 = arith.constant 0 : i32
    return %c0_i32 : i32
  }
  func.func @transform_1(%arg0: i32, %arg1: i32) -> (i32, i32, i32, i32) {
    %c0_i32 = arith.constant 0 : i32
    %c0_i32_0 = arith.constant 0 : i32
    %c0_i32_1 = arith.constant 0 : i32
    return %arg0, %c0_i32, %arg1, %c0_i32_0 : i32, i32, i32, i32
  }
  func.func @transform_2(%arg0: i32, %arg1: i32) -> (i32, i32, i32, i32) {
    %c0_i32 = arith.constant 0 : i32
    %c0_i32_0 = arith.constant 0 : i32
    %c0_i32_1 = arith.constant 0 : i32
    return %arg0, %c0_i32, %arg1, %c0_i32_0 : i32, i32, i32, i32
  }
}

</mosaic_0001>

<llo_original>
// kernel: model_forward.1
$region0: #{model_forward.1}
  #allocation0 [shape = 'u32[]', space=smem, size = 0x4, offset = 0x4, fixed_abs, tag = 'smem constant byte address 0x4 - core index']
  #allocation1 [shape = 'u32[144,128]{1,0:T(1,128)}', space=vmem, size = 0x12000, scoped, tag = 'internal scratch']
  %s0 = inlined_call_operand.vmem [shape: f32[53], index: 0, kind: input, shape index: {}]
  %s1 = inlined_call_operand.vmem [shape: f32[2,1,8,128], index: 1, kind: input, shape index: {}]
  %s2 = inlined_call_operand.vmem [shape: f32[2,3,8,128], index: 2, kind: output, shape index: {}]
  %s3 = sld [smem:[#allocation0]]
  $region45: #{model_forward.1} parent=0
    _
  %s5 = ssub.s32 1, %s3
  %s6 = scalar_select 0, %s5, %s3
  $region1: #{model_forward.1} parent=0
    #allocation2 [shape = 'u8[512]{0}', space=smem, size = 0x200, scoped, tag = 'input window, operand 0, single buffered']
    #allocation3 [shape = 's32[2]{0}', space=sflag, size = 0x8, scoped, tag = 'scoped memory for model_forward.1']
    %7 = vsyncpa [#allocation3], 0
    loop: start=0, step=1, limit=4
    $region2: #{model_forward.1} parent=1 // loop_pre_header
      _
    $region3: #{model_forward.1} parent=1 // loop_header
      %s9 = sphi 0, %s13
      %p10 = scmp.ge.s32.totalorder %s9, 4
      %s16 = sphi 0, %s28
      %s17 = sphi 0, %s24
      %s18 = sphi 0, %s16
      %s19 = sphi 0, %s17
      %s20 = sphi 0, %s18
      %s21 = sphi 0, %s19
      %s29 = sphi 0, %s29
      %s31 = sphi 0, %s29
      %s32 = sphi 0, %s31
      %s46 = sphi 0, %s32
      %s54 = sphi 0, %s56
      %s57 = sphi 0, %s54
      %s58 = sphi 0, %s57
      %s74 = sphi 0, %s58
      %s82 = sphi 0, %s84
      %s85 = sphi 0, %s82
      %s86 = sphi 0, %s85
      %s102 = sphi 0, %s86
    $region4: #{model_forward.1} parent=1 // loop_header_branch
      %12 = sbr.rel (%p10) target = $region8
    $region5: #{model_forward.1} parent=1 // loop_body
      %s14 = ssub.s32 %s9, 1
      %s15 = ssub.s32 %s9, 2
      %s22 = sadd.s32 1, %s17
      %p23 = scmp.ge.s32.totalorder %s22, 1
      %s24 = scalar_select %p23, 0, %s22
      %s25 = sadd.s32 1, %s16
      %s26 = scalar_select %p23, %s25, %s16
      %p27 = scmp.ge.s32.totalorder %s26, 2
      %s28 = scalar_select %p27, 0, %s26
      %s30 = sadd.s32 %s29, 1
      %p33 = scmp.eq.s32.totalorder %s9, 1
      %p34 = scmp.ne.s32.totalorder %s29, %s31
      %p35 = scmp.eq.s32.totalorder %s9, 0
      %p36 = por %p34, %p35
      %p37 = scmp.ne.s32.totalorder %s29, %s31
      %p38 = scmp.eq.s32.totalorder %s14, 1
      %p39 = por %p37, %p38
      %p40 = scmp.ne.s32.totalorder %s31, %s32
      %p41 = scmp.eq.s32.totalorder %s14, 0
      %p42 = por %p40, %p41
      %p43 = scmp.ne.s32.totalorder %s31, %s32
      %p44 = scmp.eq.s32.totalorder %s15, 1
      %p45 = por %p43, %p44
      %p47 = scmp.ne.s32.totalorder %s32, %s46
      %p48 = scmp.eq.s32.totalorder %s15, 0
      %p49 = por %p47, %p48
      %s50 = ssub.s32 %s16, %s28
      %s51 = ssub.s32 %s17, %s24
      %s52 = sor.u32 %s50, %s51
      %p53 = scmp.eq.s32.totalorder %s52, 0
      %s55 = sadd.s32 %s54, 1
      %s56 = scalar_select %p53, %s54, %s55
      %p59 = pneg %p53
      %p60 = scmp.eq.s32.totalorder %s9, 1
      %p61 = por %p59, %p60
      %p62 = scmp.ne.s32.totalorder %s54, %s57
      %p63 = scmp.eq.s32.totalorder %s9, 0
      %p64 = por %p62, %p63
      %p65 = scmp.ne.s32.totalorder %s54, %s57
      %p66 = scmp.eq.s32.totalorder %s14, 1
      %p67 = por %p65, %p66
      %p68 = scmp.ne.s32.totalorder %s57, %s58
      %p69 = scmp.eq.s32.totalorder %s14, 0
      %p70 = por %p68, %p69
      %p71 = scmp.ne.s32.totalorder %s57, %s58
      %p72 = scmp.eq.s32.totalorder %s15, 1
      %p73 = por %p71, %p72
      %p75 = scmp.ne.s32.totalorder %s58, %s74
      %p76 = scmp.eq.s32.totalorder %s15, 0
      %p77 = por %p75, %p76
      %s78 = ssub.s32 %s16, %s28
      %s79 = ssub.s32 %s17, %s24
      %s80 = sor.u32 %s78, %s79
      %p81 = scmp.eq.s32.totalorder %s80, 0
      %s83 = sadd.s32 %s82, 1
      %s84 = scalar_select %p81, %s82, %s83
      %p87 = pneg %p81
      %p88 = scmp.eq.s32.totalorder %s9, 1
      %p89 = por %p87, %p88
      %p90 = scmp.ne.s32.totalorder %s82, %s85
      %p91 = scmp.eq.s32.totalorder %s9, 0
      %p92 = por %p90, %p91
      %p93 = scmp.ne.s32.totalorder %s82, %s85
      %p94 = scmp.eq.s32.totalorder %s14, 1
      %p95 = por %p93, %p94
      %p96 = scmp.ne.s32.totalorder %s85, %s86
      %p97 = scmp.eq.s32.totalorder %s14, 0
      %p98 = por %p96, %p97
      %p99 = scmp.ne.s32.totalorder %s85, %s86
      %p100 = scmp.eq.s32.totalorder %s15, 1
      %p101 = por %p99, %p100
      %p103 = scmp.ne.s32.totalorder %s86, %s102
      %p104 = scmp.eq.s32.totalorder %s15, 0
      %p105 = por %p103, %p104
      %p106 = scmp.le.s32.totalorder 1, %s9
      %p107 = scmp.lt.s32.totalorder %s9, 3
      %p108 = pnand %p106, %p107
      %p109 = pneg %p108
      // Predicated region
      $region9: #{model_forward.1} parent=5 // pred_check
        _
      $region10: #{model_forward.1} parent=5 // pred_check_branch
        %111 = sbr.rel (%p108) target = $region12
      $region11: #{model_forward.1} parent=5 // pred_region
        %s112 = ssub.s32 %s9, 1
        // Predicated region
        $region13: #{model_forward.1} parent=11 // pred_check
          %p113 = pneg %p42
        $region14: #{model_forward.1} parent=11 // pred_check_branch
          %115 = sbr.rel (%p113) target = $region16
        $region15: #{model_forward.1} parent=11 // pred_region
          %s117 = ssub.s32 16, 16
          %118 = vsyncadd [#allocation3], %s117
          %s120 = sshll.u32 %s0, 4
          %s121 = int_to_ptr.vmem [resolvable:$true] %s120
          %123 = dma.vmem_to_smem %s121, 16, [#allocation2], [#allocation3]
        $region16: #{model_forward.1} parent=11 // pred_fallthru
          _
      $region12: #{model_forward.1} parent=5 // pred_fallthru
        _
      %p124 = scmp.lt.s32.totalorder %s9, 2
      // Predicated region
      $region17: #{model_forward.1} parent=5 // pred_check
        %p125 = pneg %p124
      $region18: #{model_forward.1} parent=5 // pred_check_branch
        %127 = sbr.rel (%p125) target = $region20
      $region19: #{model_forward.1} parent=5 // pred_region
        // Predicated region
        $region21: #{model_forward.1} parent=19 // pred_check
          %p128 = pneg %p64
        $region22: #{model_forward.1} parent=19 // pred_check_branch
          %130 = sbr.rel (%p128) target = $region24
        $region23: #{model_forward.1} parent=19 // pred_region
          %p131 = scmp.lt.s32.totalorder %s16, 1
          %s132 = scalar_select %p131, %s16, 1
          %p133 = scmp.lt.s32.totalorder %s17, 0
          %s134 = scalar_select %p133, %s17, 0
          %s135 = sadd.s32 %s134, %s132
          %s136 = smul.addr %s135, 8
          %s137 = scalar_lea.vmem %s1, %s136
        $region24: #{model_forward.1} parent=19 // pred_fallthru
          _
      $region20: #{model_forward.1} parent=5 // pred_fallthru
        _
      %p138 = scmp.le.s32.totalorder 1, %s9
      %p139 = scmp.lt.s32.totalorder %s9, 3
      %p140 = pnand %p138, %p139
      %p141 = pneg %p140
      // Predicated region
      $region25: #{model_forward.1} parent=5 // pred_check
        _
      $region26: #{model_forward.1} parent=5 // pred_check_branch
        %143 = sbr.rel (%p140) target = $region28
      $region27: #{model_forward.1} parent=5 // pred_region
        %s144 = ssub.s32 %s9, 1
        // Predicated region
        $region29: #{model_forward.1} parent=27 // pred_check
          %p145 = pneg %p42
        $region30: #{model_forward.1} parent=27 // pred_check_branch
          %147 = sbr.rel (%p145) target = $region32
        $region31: #{model_forward.1} parent=27 // pred_region
          %148 = dma.done [#allocation3], 16
        $region32: #{model_forward.1} parent=27 // pred_fallthru
          _
        %149 = sfence
        %p150 = pneg %p42
        %p151 = pneg %p39
        %p152 = scmp.lt.s32.totalorder %s18, 1
        %s153 = scalar_select %p152, %s18, 1
        %p154 = scmp.lt.s32.totalorder %s19, 0
        %s155 = scalar_select %p154, %s19, 0
        %s156 = sadd.s32 %s155, %s153
        %s157 = smul.addr %s156, 8
        %s158 = scalar_lea.vmem %s1, %s157
        %p159 = pneg %p70
        %p160 = pneg %p67
        %p161 = pneg %p98
        %p162 = pneg %p95
        %p163 = scmp.lt.s32.totalorder %s18, 1
        %s164 = scalar_select %p163, %s18, 1
        %p165 = scmp.lt.s32.totalorder %s19, 0
        %s166 = scalar_select %p165, %s19, 0
        %s167 = smul.addr %s164, 3
        %s168 = sadd.s32 %s166, %s167
        %s169 = smul.addr %s168, 8
        %s170 = scalar_lea.vmem %s2, %s169
        %p171 = scmp.lt.s32.totalorder %s18, 1
        %s172 = scalar_select %p171, %s18, 1
        %p173 = scmp.lt.s32.totalorder %s19, 0
        %s174 = scalar_select %p173, %s19, 0
        %s175 = sadd.s32 %s174, %s172
        %s176 = smul.addr %s175, 8
        %s177 = scalar_lea.vmem %s1, %s176
        %p178 = scmp.lt.s32.totalorder %s18, 1
        %s179 = scalar_select %p178, %s18, 1
        %p180 = scmp.lt.s32.totalorder %s19, 0
        %s181 = scalar_select %p180, %s19, 0
        %s182 = smul.addr %s179, 3
        %s183 = sadd.s32 %s181, %s182
        %s184 = smul.addr %s183, 8
        %s185 = scalar_lea.vmem %s2, %s184
        %s186 = sld [smem:[#allocation2]]
        %s187 = sld [smem:[#allocation2 + $0x1]]
        %s188 = sld [smem:[#allocation2 + $0x2]]
        %s189 = sld [smem:[#allocation2 + $0x3]]
        %s190 = sld [smem:[#allocation2 + $0x4]]
        %s191 = sld [smem:[#allocation2 + $0x5]]
        %s192 = sld [smem:[#allocation2 + $0x6]]
        %s193 = sld [smem:[#allocation2 + $0x7]]
        %s194 = sld [smem:[#allocation2 + $0x8]]
        %s195 = sld [smem:[#allocation2 + $0x9]]
        %s196 = sld [smem:[#allocation2 + $0xa]]
        %s197 = sld [smem:[#allocation2 + $0xb]]
        %s198 = sld [smem:[#allocation2 + $0xc]]
        %s199 = sld [smem:[#allocation2 + $0xd]]
        %s200 = sld [smem:[#allocation2 + $0xe]]
        %s201 = sld [smem:[#allocation2 + $0xf]]
        %s202 = sld [smem:[#allocation2 + $0x10]]
        %s203 = sld [smem:[#allocation2 + $0x11]]
        %s204 = sld [smem:[#allocation2 + $0x12]]
        %s205 = sld [smem:[#allocation2 + $0x13]]
        %s206 = sld [smem:[#allocation2 + $0x14]]
        %s207 = sld [smem:[#allocation2 + $0x15]]
        %s208 = sld [smem:[#allocation2 + $0x16]]
        %s209 = sld [smem:[#allocation2 + $0x17]]
        %s210 = sld [smem:[#allocation2 + $0x18]]
        %s211 = sld [smem:[#allocation2 + $0x19]]
        %s212 = sld [smem:[#allocation2 + $0x1a]]
        %s213 = sld [smem:[#allocation2 + $0x1b]]
        %s214 = sld [smem:[#allocation2 + $0x1c]]
        %s215 = sld [smem:[#allocation2 + $0x1d]]
        %s216 = sld [smem:[#allocation2 + $0x1e]]
        %s217 = sld [smem:[#allocation2 + $0x1f]]
        %s218 = sld [smem:[#allocation2 + $0x20]]
        %s219 = sld [smem:[#allocation2 + $0x21]]
        %s220 = sld [smem:[#allocation2 + $0x22]]
        %s221 = sld [smem:[#allocation2 + $0x23]]
        %s222 = sld [smem:[#allocation2 + $0x24]]
        %s223 = sld [smem:[#allocation2 + $0x25]]
        %s224 = sld [smem:[#allocation2 + $0x26]]
        %s225 = sld [smem:[#allocation2 + $0x27]]
        %s226 = sld [smem:[#allocation2 + $0x28]]
        %s227 = sld [smem:[#allocation2 + $0x29]]
        %s228 = sld [smem:[#allocation2 + $0x2a]]
        %s229 = sld [smem:[#allocation2 + $0x2b]]
        %s230 = sld [smem:[#allocation2 + $0x2c]]
        %s231 = sld [smem:[#allocation2 + $0x2d]]
        %s232 = sld [smem:[#allocation2 + $0x2e]]
        %s233 = sld [smem:[#allocation2 + $0x2f]]
        %s234 = sld [smem:[#allocation2 + $0x30]]
        %s235 = sld [smem:[#allocation2 + $0x31]]
        %s236 = sld [smem:[#allocation2 + $0x32]]
        %s237 = sld [smem:[#allocation2 + $0x33]]
        %s238 = sld [smem:[#allocation2 + $0x34]]
        %v239 = vld [vmem:[%s177] sm:$0xff]
        %v240 = vstv %s186
        %v241 = vmul.f32 %v240, %v239
        %v242 = vstv %s196
        %v243 = vadd.f32 %v241, %v242
        %v244 = vmax.f32 %v243, 0.0
        %v245 = vstv %s206
        %v246 = vmul.f32 %v245, %v244
        %v247 = vstv %s236
        %v248 = vadd.f32 %v247, %v246
        %v249 = vstv %s216
        %v250 = vmul.f32 %v249, %v244
        %v251 = vstv %s237
        %v252 = vadd.f32 %v251, %v250
        %v253 = vstv %s226
        %v254 = vmul.f32 %v253, %v244
        %v255 = vstv %s238
        %v256 = vadd.f32 %v255, %v254
        %v257 = vstv %s187
        %v258 = vmul.f32 %v257, %v239
        %v259 = vstv %s197
        %v260 = vadd.f32 %v258, %v259
        %v261 = vmax.f32 %v260, 0.0
        %v262 = vstv %s207
        %v263 = vmul.f32 %v262, %v261
        %v264 = vadd.f32 %v248, %v263
        %v265 = vstv %s217
        %v266 = vmul.f32 %v265, %v261
        %v267 = vadd.f32 %v252, %v266
        %v268 = vstv %s227
        %v269 = vmul.f32 %v268, %v261
        %v270 = vadd.f32 %v256, %v269
        %v271 = vstv %s188
        %v272 = vmul.f32 %v271, %v239
        %v273 = vstv %s198
        %v274 = vadd.f32 %v272, %v273
        %v275 = vmax.f32 %v274, 0.0
        %v276 = vstv %s208
        %v277 = vmul.f32 %v276, %v275
        %v278 = vadd.f32 %v264, %v277
        %v279 = vstv %s218
        %v280 = vmul.f32 %v279, %v275
        %v281 = vadd.f32 %v267, %v280
        %v282 = vstv %s228
        %v283 = vmul.f32 %v282, %v275
        %v284 = vadd.f32 %v270, %v283
        %v285 = vstv %s189
        %v286 = vmul.f32 %v285, %v239
        %v287 = vstv %s199
        %v288 = vadd.f32 %v286, %v287
        %v289 = vmax.f32 %v288, 0.0
        %v290 = vstv %s209
        %v291 = vmul.f32 %v290, %v289
        %v292 = vadd.f32 %v278, %v291
        %v293 = vstv %s219
        %v294 = vmul.f32 %v293, %v289
        %v295 = vadd.f32 %v281, %v294
        %v296 = vstv %s229
        %v297 = vmul.f32 %v296, %v289
        %v298 = vadd.f32 %v284, %v297
        %v299 = vstv %s190
        %v300 = vmul.f32 %v299, %v239
        %v301 = vstv %s200
        %v302 = vadd.f32 %v300, %v301
        %v303 = vmax.f32 %v302, 0.0
        %v304 = vstv %s210
        %v305 = vmul.f32 %v304, %v303
        %v306 = vadd.f32 %v292, %v305
        %v307 = vstv %s220
        %v308 = vmul.f32 %v307, %v303
        %v309 = vadd.f32 %v295, %v308
        %v310 = vstv %s230
        %v311 = vmul.f32 %v310, %v303
        %v312 = vadd.f32 %v298, %v311
        %v313 = vstv %s191
        %v314 = vmul.f32 %v313, %v239
        %v315 = vstv %s201
        %v316 = vadd.f32 %v314, %v315
        %v317 = vmax.f32 %v316, 0.0
        %v318 = vstv %s211
        %v319 = vmul.f32 %v318, %v317
        %v320 = vadd.f32 %v306, %v319
        %v321 = vstv %s221
        %v322 = vmul.f32 %v321, %v317
        %v323 = vadd.f32 %v309, %v322
        %v324 = vstv %s231
        %v325 = vmul.f32 %v324, %v317
        %v326 = vadd.f32 %v312, %v325
        %v327 = vstv %s192
        %v328 = vmul.f32 %v327, %v239
        %v329 = vstv %s202
        %v330 = vadd.f32 %v328, %v329
        %v331 = vmax.f32 %v330, 0.0
        %v332 = vstv %s212
        %v333 = vmul.f32 %v332, %v331
        %v334 = vadd.f32 %v320, %v333
        %v335 = vstv %s222
        %v336 = vmul.f32 %v335, %v331
        %v337 = vadd.f32 %v323, %v336
        %v338 = vstv %s232
        %v339 = vmul.f32 %v338, %v331
        %v340 = vadd.f32 %v326, %v339
        %v341 = vstv %s193
        %v342 = vmul.f32 %v341, %v239
        %v343 = vstv %s203
        %v344 = vadd.f32 %v342, %v343
        %v345 = vmax.f32 %v344, 0.0
        %v346 = vstv %s213
        %v347 = vmul.f32 %v346, %v345
        %v348 = vadd.f32 %v334, %v347
        %v349 = vstv %s223
        %v350 = vmul.f32 %v349, %v345
        %v351 = vadd.f32 %v337, %v350
        %v352 = vstv %s233
        %v353 = vmul.f32 %v352, %v345
        %v354 = vadd.f32 %v340, %v353
        %v355 = vstv %s194
        %v356 = vmul.f32 %v355, %v239
        %v357 = vstv %s204
        %v358 = vadd.f32 %v356, %v357
        %v359 = vmax.f32 %v358, 0.0
        %v360 = vstv %s214
        %v361 = vmul.f32 %v360, %v359
        %v362 = vadd.f32 %v348, %v361
        %v363 = vstv %s224
        %v364 = vmul.f32 %v363, %v359
        %v365 = vadd.f32 %v351, %v364
        %v366 = vstv %s234
        %v367 = vmul.f32 %v366, %v359
        %v368 = vadd.f32 %v354, %v367
        %v369 = vstv %s195
        %v370 = vmul.f32 %v369, %v239
        %v371 = vstv %s205
        %v372 = vadd.f32 %v370, %v371
        %v373 = vmax.f32 %v372, 0.0
        %v374 = vstv %s215
        %v375 = vmul.f32 %v374, %v373
        %v376 = vadd.f32 %v362, %v375
        %v377 = vstv %s225
        %v378 = vmul.f32 %v377, %v373
        %v379 = vadd.f32 %v365, %v378
        %v380 = vstv %s235
        %v381 = vmul.f32 %v380, %v373
        %v382 = vadd.f32 %v368, %v381
        %v383 = vmax.f32 %v376, 0.0
        %384 = vst [vmem:[%s185] sm:$0xff] %v383
        %v385 = vmax.f32 %v379, 0.0
        %s386 = sadd.s32 0, 8
        %s387 = scalar_lea.vmem %s185, %s386
        %388 = vst [vmem:[%s387] sm:$0xff] %v385
        %v389 = vmax.f32 %v382, 0.0
        %s390 = sadd.s32 0, 16
        %s391 = scalar_lea.vmem %s185, %s390
        %392 = vst [vmem:[%s391] sm:$0xff] %v389
        %p393 = scmp.lt.s32.totalorder %s18, 1
        %s394 = scalar_select %p393, %s18, 1
        %p395 = scmp.lt.s32.totalorder %s19, 0
        %s396 = scalar_select %p395, %s19, 0
        %s397 = smul.addr %s394, 3
        %s398 = sadd.s32 %s396, %s397
        %s399 = smul.addr %s398, 8
        %s400 = scalar_lea.vmem %s2, %s399
        // Predicated region
        $region33: #{model_forward.1} parent=27 // pred_check
          %p401 = pneg %p95
        $region34: #{model_forward.1} parent=27 // pred_check_branch
          %403 = sbr.rel (%p401) target = $region36
        $region35: #{model_forward.1} parent=27 // pred_region
          _
        $region36: #{model_forward.1} parent=27 // pred_fallthru
          _
      $region28: #{model_forward.1} parent=5 // pred_fallthru
        _
      %p404 = scmp.le.s32.totalorder 2, %s9
      // Predicated region
      $region37: #{model_forward.1} parent=5 // pred_check
        %p405 = pneg %p404
      $region38: #{model_forward.1} parent=5 // pred_check_branch
        %407 = sbr.rel (%p405) target = $region40
      $region39: #{model_forward.1} parent=5 // pred_region
        %s408 = ssub.s32 %s9, 2
        // Predicated region
        $region41: #{model_forward.1} parent=39 // pred_check
          %p409 = pneg %p101
        $region42: #{model_forward.1} parent=39 // pred_check_branch
          %411 = sbr.rel (%p409) target = $region44
        $region43: #{model_forward.1} parent=39 // pred_region
          %p412 = scmp.lt.s32.totalorder %s20, 1
          %s413 = scalar_select %p412, %s20, 1
          %p414 = scmp.lt.s32.totalorder %s21, 0
          %s415 = scalar_select %p414, %s21, 0
          %s416 = smul.addr %s413, 3
          %s417 = sadd.s32 %s415, %s416
          %s418 = smul.addr %s417, 8
          %s419 = scalar_lea.vmem %s2, %s418
        $region44: #{model_forward.1} parent=39 // pred_fallthru
          _
      $region40: #{model_forward.1} parent=5 // pred_fallthru
        _
    $region6: #{model_forward.1} parent=1 // loop_footer
      %s13 = sadd.s32 1, %s9
    $region7: #{model_forward.1} parent=1 // loop_footer_branch
      %8 = sbr.rel target = $region3
    $region8: #{model_forward.1} parent=1 // loop_exit
      _
    %420 = vsyncpa [#allocation3], 1
    %s421 = scalar_lea.sflag [#allocation3], 1
    %422 = vsyncpa %s421, 1

</llo_original>
